<compile_context>
chip_gen: v6e
topology: v6e:2x2x1
jax: 0.10.0
libtpu: 0.0.40
codegen_flags: <defaults>
</compile_context>

<pallas_src>
import jax
import jax.numpy as jnp
from jax.experimental import pallas as pl
from jax.experimental.pallas import tpu as pltpu


# --------------------------------------------------------------------------- #
# Kernels
# --------------------------------------------------------------------------- #

def ffn_kernel_accum_out(x_ref, w1_ref, b1_ref, w2_ref, b2_ref, o_ref):
    """f32-output variant: accumulate straight into the resident output block."""
    k = pl.program_id(1)

    @pl.when(k == 0)
    def _init():
        # Fuse the second bias into the accumulator (one broadcast per row tile).
        o_ref[...] = jnp.broadcast_to(b2_ref[...].astype(jnp.float32), o_ref.shape)

    # linear1 slice: (tm, th) = x (tm, E) @ W1[:, k*th:(k+1)*th]
    h = jnp.dot(x_ref[...], w1_ref[...], preferred_element_type=jnp.float32)
    h = jnp.maximum(h + b1_ref[...].astype(jnp.float32), 0.0)   # bias + ReLU (f32)
    # dropout (eval mode) == identity

    # linear2 partial: accumulate relu(h_k) @ W2[k*th:(k+1)*th, :] in f32.
    o_ref[...] += jnp.dot(h.astype(w2_ref.dtype), w2_ref[...],
                          preferred_element_type=jnp.float32)


def ffn_kernel_scratch(x_ref, w1_ref, b1_ref, w2_ref, b2_ref, o_ref, acc_ref):
    """Non-f32 output variant: accumulate into f32 scratch, downcast at the end."""
    k = pl.program_id(1)

    @pl.when(k == 0)
    def _init():
        acc_ref[...] = jnp.broadcast_to(b2_ref[...].astype(jnp.float32),
                                        acc_ref.shape)

    h = jnp.dot(x_ref[...], w1_ref[...], preferred_element_type=jnp.float32)
    h = jnp.maximum(h + b1_ref[...].astype(jnp.float32), 0.0)
    acc_ref[...] += jnp.dot(h.astype(w2_ref.dtype), w2_ref[...],
                            preferred_element_type=jnp.float32)

    @pl.when(k == pl.num_programs(1) - 1)
    def _finalize():
        o_ref[...] = acc_ref[...].astype(o_ref.dtype)


# --------------------------------------------------------------------------- #
# VMEM-aware tile selection
# --------------------------------------------------------------------------- #

def _round_up(x, m):
    return ((x + m - 1) // m) * m


def _vmem_capacity_bytes():
    """Per-core VMEM capacity (64 MiB on v7x, 128 MiB on v5e/v6e)."""
    try:
        cap = getattr(pltpu.get_tpu_info(), "vmem_capacity_bytes", None)
        if cap:
            return int(cap)
    except Exception:
        pass
    return 64 * 1024 * 1024   # conservative fallback (v7x per-TC)


def _footprint_bytes(tm, th, E, act_item, w_item, out_item, use_scratch):
    return (2 * tm * E * act_item          # x tile, double-buffered
            + 2 * tm * E * out_item        # out tile, double-buffered
            + 2 * E * th * w_item          # W1 tile, double-buffered
            + 2 * th * E * w_item          # W2 tile, double-buffered
            + 2 * (th + E) * w_item        # biases
            + (tm * E * 4 if use_scratch else 0))   # f32 accumulator scratch


def _divisor_tile(H, max_th):
    """Largest lane-aligned tile <= max_th that divides H exactly (prefer 256
    multiples for the 256-wide MXUs, then 128).  The reduction axis must never
    have a ragged/padded block, so only exact divisors are allowed; if none
    exists fall back to the full hidden dim."""
    if H <= max_th:
        return H
    for mult in (256, 128):
        t = max_th - (max_th % mult)
        while t >= mult:
            if H % t == 0:
                return t
            t -= mult
    return H


def _auto_tiles(M, E, H, act_item, w_item, out_item, use_scratch, vmem_budget):
    def fp(tm, th):
        return _footprint_bytes(tm, th, E, act_item, w_item, out_item, use_scratch)

    # Row tile: MXU/sublane friendly; ensure >= 2 row tiles when M permits so
    # the "parallel" grid axis shards across v7x's two TensorCores.
    max_tm = 1024 if act_item <= 2 else 512
    if M <= 256:
        tm = M
    elif M < 2 * max_tm:
        tm = min(max_tm, _round_up(pl.cdiv(M, 2), 256))
    else:
        tm = max_tm

    # Hidden tile: prefer th == H (weights DMA'd exactly once for the whole
    # kernel); otherwise shrink th first, and only then tm.
    th = H
    if fp(tm, th) > vmem_budget:
        for max_th in (2048, 1024, 512, 256, 128):
            if max_th >= H:
                continue
            th = _divisor_tile(H, max_th)
            if fp(tm, th) <= vmem_budget:
                break
        while fp(tm, th) > vmem_budget and tm > 256:
            tm = max(256, _round_up(tm // 2, 256))
        while fp(tm, th) > vmem_budget and tm > 8:
            tm = max(8, _round_up(tm // 2, 8))
    return tm, th


# --------------------------------------------------------------------------- #
# Wrapper
# --------------------------------------------------------------------------- #

def feed_forward_network(x, w1, b1, w2, b2, *, tm=None, th=None,
                         compute_dtype=None):
    """relu(x @ w1 + b1) @ w2 + b2  (dropout is eval-mode identity).

    x: [M, E]; w1: [E, H]; b1: [1, H]; w2: [H, E]; b2: [1, E]
    (weights stored transposed relative to PyTorch nn.Linear).
    compute_dtype: optional MXU input dtype (e.g. jnp.bfloat16) for x/W1/W2;
    accumulation stays f32 and the output keeps x.dtype.
    """
    M, E = x.shape
    E_w, H = w1.shape
    assert E_w == E and w2.shape == (H, E)
    assert b1.shape == (1, H) and b2.shape == (1, E)
    out_dtype = x.dtype

    if compute_dtype is not None:
        x = x.astype(compute_dtype)
        w1 = w1.astype(compute_dtype)
        w2 = w2.astype(compute_dtype)

    act_item = jnp.dtype(x.dtype).itemsize
    w_item = jnp.dtype(w1.dtype).itemsize
    out_item = jnp.dtype(out_dtype).itemsize
    use_scratch = out_dtype != jnp.float32     # f32 outputs accumulate in-place

    vmem_cap = _vmem_capacity_bytes()
    vmem_budget = int(0.85 * vmem_cap)

    auto_tm, auto_th = _auto_tiles(M, E, H, act_item, w_item, out_item,
                                   use_scratch, vmem_budget)
    if tm is None:
        tm = auto_tm
    else:
        tm = min(tm, M)
        assert tm == M or tm % 8 == 0, "manual tm must be a multiple of 8"
    if th is None:
        th = auto_th
    else:
        th = min(th, H)
        assert H % th == 0, "manual th must divide H (no ragged reduction block)"

    grid = (pl.cdiv(M, tm), pl.cdiv(H, th))

    footprint = _footprint_bytes(tm, th, E, act_item, w_item, out_item, use_scratch)
    # Clamp the scoped-VMEM limit to physical capacity minus headroom.
    vmem_limit = int(min(vmem_cap - (2 << 20),
                         max(footprint * 5 // 4 + (2 << 20), 32 << 20)))

    # Weights (and b1) are re-streamed once per row tile unless th == H keeps
    # their block index constant (single DMA for the whole kernel).
    n_weight_passes = 1 if th == H else pl.cdiv(M, tm)
    cost = pl.CostEstimate(
        flops=4 * M * E * H,                                   # two matmuls
        transcendentals=0,
        bytes_accessed=(M * E * act_item + M * E * out_item    # x in + out
                        + n_weight_passes * (2 * E * H + H) * w_item
                        + E * w_item))

    kernel = ffn_kernel_scratch if use_scratch else ffn_kernel_accum_out
    scratch_shapes = [pltpu.VMEM((tm, E), jnp.float32)] if use_scratch else []

    return pl.pallas_call(
        kernel,
        out_shape=jax.ShapeDtypeStruct((M, E), out_dtype),
        grid_spec=pltpu.PrefetchScalarGridSpec(
            num_scalar_prefetch=0,
            grid=grid,
            in_specs=[
                pl.BlockSpec((tm, E), lambda i, k: (i, 0)),   # x row tile
                pl.BlockSpec((E, th), lambda i, k: (0, k)),   # W1 hidden tile
                pl.BlockSpec((1, th), lambda i, k: (0, k)),   # b1 hidden tile
                pl.BlockSpec((th, E), lambda i, k: (k, 0)),   # W2 hidden tile
                pl.BlockSpec((1, E), lambda i, k: (0, 0)),    # b2 (constant)
            ],
            out_specs=pl.BlockSpec((tm, E), lambda i, k: (i, 0)),
            scratch_shapes=scratch_shapes,
        ),
        compiler_params=pltpu.CompilerParams(
            dimension_semantics=("parallel", "arbitrary"),
            vmem_limit_bytes=vmem_limit),
        cost_estimate=cost,
    )(x, w1, b1, w2, b2)


def init_linear_params(key, in_features, out_features, dtype=jnp.float32):
    # Deterministic init mimicking nn.Linear: U(-1/sqrt(fan_in), 1/sqrt(fan_in)).
    kw, kb = jax.random.split(key)
    bound = 1.0 / (in_features ** 0.5)
    # stored as [in_features, out_features]  (transpose of PyTorch's weight)
    w = jax.random.uniform(kw, (in_features, out_features), jnp.float32,
                           minval=-bound, maxval=bound).astype(dtype)
    b = jax.random.uniform(kb, (1, out_features), jnp.float32,
                           minval=-bound, maxval=bound).astype(dtype)
    return w, b


if __name__ == "__main__":
    key = jax.random.PRNGKey(0)
    k_x, k_l1, k_l2, k_x2, k_l3, k_l4, k_x3 = jax.random.split(key, 7)

    # ---- Test 1: module-sized shapes (batch=2, seq=8, E=32, H=64) ----------
    batch, seq, embed_dim, hidden_dim = 2, 8, 32, 64
    x = jax.random.normal(k_x, (batch, seq, embed_dim), jnp.float32)
    w1, b1 = init_linear_params(k_l1, embed_dim, hidden_dim)
    w2, b2 = init_linear_params(k_l2, hidden_dim, embed_dim)

    x2d = x.reshape(batch * seq, embed_dim)
    out2d = feed_forward_network(x2d, w1, b1, w2, b2)
    out = out2d.reshape(batch, seq, embed_dim)
    jax.block_until_ready(out)

    ref = jnp.maximum(x2d @ w1 + b1, 0.0) @ w2 + b2
    assert jnp.allclose(out2d, ref, atol=1e-5, rtol=1e-5), float(
        jnp.max(jnp.abs(out2d - ref)))

    # ---- Test 2: auto-tiled grid (2 row tiles, weights fully resident) -----
    M2, E2, H2 = 1024, 128, 512
    xb = jax.random.normal(k_x2, (M2, E2), jnp.float32)
    w1b, b1b = init_linear_params(k_l3, E2, H2)
    w2b, b2b = init_linear_params(k_l4, H2, E2)

    outb = feed_forward_network(xb, w1b, b1b, w2b, b2b)
    jax.block_until_ready(outb)
    refb = jnp.maximum(xb @ w1b + b1b, 0.0) @ w2b + b2b
    assert jnp.allclose(outb, refb, atol=1e-4, rtol=1e-4), float(
        jnp.max(jnp.abs(outb - refb)))

    # ---- Test 2b: manual th < H exercises the multi-step hidden reduction --
    outc = feed_forward_network(xb, w1b, b1b, w2b, b2b, tm=512, th=256)
    jax.block_until_ready(outc)
    assert jnp.allclose(outc, refb, atol=1e-4, rtol=1e-4), float(
        jnp.max(jnp.abs(outc - refb)))

    # ---- Test 3: bf16 in/out exercises the f32-scratch accumulation path ---
    M3, E3, H3 = 16, 128, 256
    xc = jax.random.normal(k_x3, (M3, E3), jnp.float32).astype(jnp.bfloat16)
    w1c, b1c = init_linear_params(k_l1, E3, H3, jnp.bfloat16)
    w2c, b2c = init_linear_params(k_l2, H3, E3, jnp.bfloat16)
    outd = feed_forward_network(xc, w1c, b1c, w2c, b2c)
    jax.block_until_ready(outd)
    refd = (jnp.maximum(xc.astype(jnp.float32) @ w1c.astype(jnp.float32)
                        + b1c.astype(jnp.float32), 0.0)
            @ w2c.astype(jnp.float32) + b2c.astype(jnp.float32))
    assert jnp.allclose(outd.astype(jnp.float32), refd, atol=5e-2, rtol=5e-2), float(
        jnp.max(jnp.abs(outd.astype(jnp.float32) - refd)))

    print("KERNEL_OK")
</pallas_src>

<mosaic_0001>
module attributes {stable_mosaic.version = 11 : i64} {
  func.func @ffn_kernel_accum_out(%arg0: i32, %arg1: i32, %arg2: memref<16x32xf32, #tpu.memory_space<vmem>>, %arg3: memref<32x64xf32, #tpu.memory_space<vmem>>, %arg4: memref<1x64xf32, #tpu.memory_space<vmem>>, %arg5: memref<64x32xf32, #tpu.memory_space<vmem>>, %arg6: memref<1x32xf32, #tpu.memory_space<vmem>>, %arg7: memref<16x32xf32, #tpu.memory_space<vmem>>) attributes {dimension_semantics = [#tpu.dimension_semantics<parallel>, #tpu.dimension_semantics<arbitrary>], iteration_bounds = array<i64: 1, 1>, scalar_prefetch = 0 : i64, scratch_operands = 0 : i64, tpu.core_type = #tpu.core_type<tc>, window_params = [{transform_indices = @transform_0, window_bounds = array<i64: 16, 32>}, {transform_indices = @transform_1, window_bounds = array<i64: 32, 64>}, {transform_indices = @transform_2, window_bounds = array<i64: 1, 64>}, {transform_indices = @transform_3, window_bounds = array<i64: 64, 32>}, {pipeline_mode = #tpu.pipeline_mode<synchronous>, transform_indices = @transform_4, window_bounds = array<i64: 1, 32>}, {transform_indices = @transform_5, window_bounds = array<i64: 16, 32>}]} {
    %c0_i32 = arith.constant 0 : i32
    %0 = arith.cmpi eq, %arg1, %c0_i32 : i32
    %1 = arith.extui %0 : i1 to i32
    %c0_i32_0 = arith.constant 0 : i32
    %2 = arith.cmpi ne, %1, %c0_i32_0 : i32
    scf.if %2 {
      %c0_14 = arith.constant 0 : index
      %c0_15 = arith.constant 0 : index
      %16 = vector.load %arg6[%c0_14, %c0_15] : memref<1x32xf32, #tpu.memory_space<vmem>>, vector<1x32xf32>
      %17 = vector.shape_cast %16 : vector<1x32xf32> to vector<1x32xf32>
      %18 = vector.broadcast %17 : vector<1x32xf32> to vector<16x32xf32>
      %c0_16 = arith.constant 0 : index
      %c0_17 = arith.constant 0 : index
      %19 = vector.load %arg7[%c0_16, %c0_17] : memref<16x32xf32, #tpu.memory_space<vmem>>, vector<16x32xf32>
      tpu.vector_store %arg7[%c0_16, %c0_17], %18 {strides = array<i32>} : memref<16x32xf32, #tpu.memory_space<vmem>>, vector<16x32xf32>,
    } else {
    }
    %c0 = arith.constant 0 : index
    %c0_1 = arith.constant 0 : index
    %3 = vector.load %arg2[%c0, %c0_1] : memref<16x32xf32, #tpu.memory_space<vmem>>, vector<16x32xf32>
    %c0_2 = arith.constant 0 : index
    %c0_3 = arith.constant 0 : index
    %4 = vector.load %arg3[%c0_2, %c0_3] : memref<32x64xf32, #tpu.memory_space<vmem>>, vector<32x64xf32>
    %cst = arith.constant dense<0.000000e+00> : vector<16x64xf32>
    %5 = tpu.matmul %3, %4, %cst {dimension_numbers = #tpu.dot_dimension_numbers<[1], [0], [0], [1], [0, 0, 1, 1], [], []>} : vector<16x32xf32>, vector<32x64xf32>, vector<16x64xf32> -> vector<16x64xf32>
    %c0_4 = arith.constant 0 : index
    %c0_5 = arith.constant 0 : index
    %6 = vector.load %arg4[%c0_4, %c0_5] : memref<1x64xf32, #tpu.memory_space<vmem>>, vector<1x64xf32>
    %7 = vector.broadcast %6 : vector<1x64xf32> to vector<16x64xf32>
    %8 = arith.addf %5, %7 : vector<16x64xf32>
    %cst_6 = arith.constant 0.000000e+00 : f32
    %9 = vector.broadcast %cst_6 : f32 to vector<16x64xf32>
    %10 = arith.maximumf %8, %9 : vector<16x64xf32>
    %c0_7 = arith.constant 0 : index
    %c0_8 = arith.constant 0 : index
    %11 = vector.load %arg7[%c0_7, %c0_8] : memref<16x32xf32, #tpu.memory_space<vmem>>, vector<16x32xf32>
    %c0_9 = arith.constant 0 : index
    %c0_10 = arith.constant 0 : index
    %12 = vector.load %arg5[%c0_9, %c0_10] : memref<64x32xf32, #tpu.memory_space<vmem>>, vector<64x32xf32>
    %cst_11 = arith.constant dense<0.000000e+00> : vector<16x32xf32>
    %13 = tpu.matmul %10, %12, %cst_11 {dimension_numbers = #tpu.dot_dimension_numbers<[1], [0], [0], [1], [0, 0, 1, 1], [], []>} : vector<16x64xf32>, vector<64x32xf32>, vector<16x32xf32> -> vector<16x32xf32>
    %14 = arith.addf %11, %13 : vector<16x32xf32>
    %c0_12 = arith.constant 0 : index
    %c0_13 = arith.constant 0 : index
    %15 = vector.load %arg7[%c0_12, %c0_13] : memref<16x32xf32, #tpu.memory_space<vmem>>, vector<16x32xf32>
    tpu.vector_store %arg7[%c0_12, %c0_13], %14 {strides = array<i32>} : memref<16x32xf32, #tpu.memory_space<vmem>>, vector<16x32xf32>,
    return
  }
  func.func @transform_0(%arg0: i32, %arg1: i32) -> (i32, i32) {
    %c0_i32 = arith.constant 0 : i32
    %c0_i32_0 = arith.constant 0 : i32
    return %arg0, %c0_i32 : i32, i32
  }
  func.func @transform_1(%arg0: i32, %arg1: i32) -> (i32, i32) {
    %c0_i32 = arith.constant 0 : i32
    %c0_i32_0 = arith.constant 0 : i32
    return %c0_i32, %arg1 : i32, i32
  }
  func.func @transform_2(%arg0: i32, %arg1: i32) -> (i32, i32) {
    %c0_i32 = arith.constant 0 : i32
    %c0_i32_0 = arith.constant 0 : i32
    return %c0_i32, %arg1 : i32, i32
  }
  func.func @transform_3(%arg0: i32, %arg1: i32) -> (i32, i32) {
    %c0_i32 = arith.constant 0 : i32
    %c0_i32_0 = arith.constant 0 : i32
    return %arg1, %c0_i32 : i32, i32
  }
  func.func @transform_4(%arg0: i32, %arg1: i32) -> (i32, i32) {
    %c0_i32 = arith.constant 0 : i32
    %c0_i32_0 = arith.constant 0 : i32
    %c0_i32_1 = arith.constant 0 : i32
    return %c0_i32, %c0_i32_0 : i32, i32
  }
  func.func @transform_5(%arg0: i32, %arg1: i32) -> (i32, i32) {
    %c0_i32 = arith.constant 0 : i32
    %c0_i32_0 = arith.constant 0 : i32
    return %arg0, %c0_i32 : i32, i32
  }
}

</mosaic_0001>

<llo_original>
// kernel: tpu_custom_call.1
$region0: #{tpu_custom_call.1}
  #allocation0 [shape = 'u32[]', space=smem, size = 0x4, offset = 0x4, fixed_abs, tag = 'smem constant byte address 0x4 - core index']
  #allocation1 [shape = 'u32[144,128]{1,0:T(1,128)}', space=vmem, size = 0x12000, scoped, tag = 'internal scratch']
  %s0 = inlined_call_operand.vmem [shape: f32[16,32], index: 0, kind: input, shape index: {}]
  %s1 = inlined_call_operand.vmem [shape: f32[32,64], index: 1, kind: input, shape index: {}]
  %s2 = inlined_call_operand.vmem [shape: f32[1,64], index: 2, kind: input, shape index: {}]
  %s3 = inlined_call_operand.vmem [shape: f32[64,32], index: 3, kind: input, shape index: {}]
  %s4 = inlined_call_operand.vmem [shape: f32[1,32], index: 4, kind: input, shape index: {}]
  %s5 = inlined_call_operand.hbm [shape: f32[16,32], index: 5, kind: output, shape index: {}]
  %s6 = sld [smem:[#allocation0]]
  $region34: #{tpu_custom_call.1} parent=0
    _
  %s8 = ssub.s32 1, %s6
  %s9 = scalar_select 0, %s8, %s6
  $region1: #{tpu_custom_call.1} parent=0
    #allocation2 [shape = 'u8[8192]{0}', space=vmem, size = 0x2000, scoped, tag = 'output window, operand 0, single buffered']
    #allocation3 [shape = 's32[1]{0}', space=sflag, size = 0x4, scoped, tag = 'scoped memory for tpu_custom_call.1']
    %10 = vsyncpa [#allocation3], 0
    // Predicated region
    $region2: #{tpu_custom_call.1} parent=1 // pred_check
      _
    $region3: #{tpu_custom_call.1} parent=1 // pred_check_branch
      %12 = sbr.rel (0) target = $region5
    $region4: #{tpu_custom_call.1} parent=1 // pred_region
      _
    $region5: #{tpu_custom_call.1} parent=1 // pred_fallthru
      _
    // Predicated region
    $region6: #{tpu_custom_call.1} parent=1 // pred_check
      _
    $region7: #{tpu_custom_call.1} parent=1 // pred_check_branch
      %14 = sbr.rel (0) target = $region9
    $region8: #{tpu_custom_call.1} parent=1 // pred_region
      _
    $region9: #{tpu_custom_call.1} parent=1 // pred_fallthru
      _
    // Predicated region
    $region10: #{tpu_custom_call.1} parent=1 // pred_check
      _
    $region11: #{tpu_custom_call.1} parent=1 // pred_check_branch
      %16 = sbr.rel (0) target = $region13
    $region12: #{tpu_custom_call.1} parent=1 // pred_region
      _
    $region13: #{tpu_custom_call.1} parent=1 // pred_fallthru
      _
    // Predicated region
    $region14: #{tpu_custom_call.1} parent=1 // pred_check
      _
    $region15: #{tpu_custom_call.1} parent=1 // pred_check_branch
      %18 = sbr.rel (0) target = $region17
    $region16: #{tpu_custom_call.1} parent=1 // pred_region
      _
    $region17: #{tpu_custom_call.1} parent=1 // pred_fallthru
      _
    // Predicated region
    $region18: #{tpu_custom_call.1} parent=1 // pred_check
      _
    $region19: #{tpu_custom_call.1} parent=1 // pred_check_branch
      %20 = sbr.rel (0) target = $region21
    $region20: #{tpu_custom_call.1} parent=1 // pred_region
      _
    $region21: #{tpu_custom_call.1} parent=1 // pred_fallthru
      _
    %p21 = scmp.eq.s32.totalorder 0, 0
    // Predicated region
    $region22: #{tpu_custom_call.1} parent=1 // pred_check
      %p22 = pneg %p21
    $region23: #{tpu_custom_call.1} parent=1 // pred_check_branch
      %24 = sbr.rel (%p22) target = $region25
    $region24: #{tpu_custom_call.1} parent=1 // pred_region
      %v25 = vld [vmem:[%s4] sm:$0x1]
      %v27 = vlaneseq
      %v28 = vshrl.u32 %v27, 7
      %v29 = vsub.s32 0, %v28
      %v30 = vrot.slane %v25, %v29
      %vm32 = vcmask 261120
      %33 = vst.msk [vmem:[#allocation2] sm:$0xff] %vm32, %v30
      %34 = vst.msk [vmem:[#allocation2 + $0x8] sm:$0xff] %vm32, %v30
    $region25: #{tpu_custom_call.1} parent=1 // pred_fallthru
      _
    %v35 = vld [vmem:[%s0] sm:$0xff]
    %v36 = vld [vmem:[%s0 + $0x8] sm:$0xff]
    %v37 = vld [vmem:[%s1] sm:$0xff]
    %v38 = vld [vmem:[%s1 + $0x8] sm:$0xff]
    %v39 = vld [vmem:[%s1 + $0x10] sm:$0xff]
    %v40 = vld [vmem:[%s1 + $0x18] sm:$0xff]
    %v41 = vld [vmem:[%s2] sm:$0x1]
    %v43 = vlaneseq
    %v44 = vshrl.u32 %v43, 7
    %v45 = vsub.s32 0, %v44
    %v46 = vrot.slane %v41, %v45
    %vm48 = vcmask 261120
    %v50 = vsel %vm48, %v35, 0
    %v53 = vsel %vm48, %v36, 0
    %55 = vmatprep.subr.mxu0 0.0
    %56 = vmatpush1.msra.mxu0 0.0
    %57 = vmatprep.subr.mxu0 0.0
    %58 = vmatpush1.msra.mxu0 0.0
    %59 = vmatprep.subr.mxu0 0.0
    %60 = vmatpush1.msra.mxu0 0.0
    %61 = vmatprep.subr.mxu0 0.0
    %62 = vmatpush1.msra.mxu0 0.0
    %63 = vmatprep.subr.mxu0 0.0
    %64 = vmatpush1.msra.mxu0 0.0
    %65 = vmatprep.subr.mxu0 0.0
    %66 = vmatpush1.msra.mxu0 0.0
    %67 = vmatprep.subr.mxu0 0.0
    %68 = vmatpush1.msra.mxu0 0.0
    %69 = vmatprep.subr.mxu0 0.0
    %70 = vmatpush1.msra.mxu0 0.0
    %71 = vmatprep.subr.mxu0 0.0
    %72 = vmatpush1.msra.mxu0 0.0
    %73 = vmatprep.subr.mxu0 0.0
    %74 = vmatpush1.msra.mxu0 0.0
    %75 = vmatprep.subr.mxu0 0.0
    %76 = vmatpush1.msra.mxu0 0.0
    %77 = vmatprep.subr.mxu0 0.0
    %78 = vmatpush1.msra.mxu0 0.0
    %79 = vmatprep.subr.mxu0 0.0
    %80 = vmatpush1.msra.mxu0 %v40
    %81 = vmatprep.subr.mxu0 0.0
    %82 = vmatpush1.msra.mxu0 %v39
    %83 = vmatprep.subr.mxu0 0.0
    %84 = vmatpush1.msra.mxu0 %v38
    %85 = vmatprep.subr.mxu0 0.0
    %86 = vmatpush1.msra.mxu0 %v37
    %87 = vmatprep.subr.mxu0 0.0
    %88 = vmatpush2.msra.mxu0 0.0
    %89 = vmatprep.subr.mxu0 0.0
    %90 = vmatpush2.msra.mxu0 0.0
    %91 = vmatprep.subr.mxu0 0.0
    %92 = vmatpush2.msra.mxu0 0.0
    %93 = vmatprep.subr.mxu0 0.0
    %94 = vmatpush2.msra.mxu0 0.0
    %95 = vmatprep.subr.mxu0 0.0
    %96 = vmatpush2.msra.mxu0 0.0
    %97 = vmatprep.subr.mxu0 0.0
    %98 = vmatpush2.msra.mxu0 0.0
    %99 = vmatprep.subr.mxu0 0.0
    %100 = vmatpush2.msra.mxu0 0.0
    %101 = vmatprep.subr.mxu0 0.0
    %102 = vmatpush2.msra.mxu0 0.0
    %103 = vmatprep.subr.mxu0 0.0
    %104 = vmatpush2.msra.mxu0 0.0
    %105 = vmatprep.subr.mxu0 0.0
    %106 = vmatpush2.msra.mxu0 0.0
    %107 = vmatprep.subr.mxu0 0.0
    %108 = vmatpush2.msra.mxu0 0.0
    %109 = vmatprep.subr.mxu0 0.0
    %110 = vmatpush2.msra.mxu0 0.0
    %111 = vmatprep.subr.mxu0 0.0
    %112 = vmatpush2.msra.mxu0 0.0
    %113 = vmatprep.subr.mxu0 0.0
    %114 = vmatpush2.msra.mxu0 0.0
    %115 = vmatprep.subr.mxu0 0.0
    %116 = vmatpush2.msra.mxu0 0.0
    %117 = vmatprep.subr.mxu0 0.0
    %118 = vmatpush2.msra.mxu0 0.0
    %119 = vmatprep.mubr.f32.mxu0 0.0
    %120 = vmatmul.mubr.f32.gmra.mxu0 %v50
    %v121 = vpop.f32.mrf.mxu0
    %v122 = vadd.f32 %v46, %v121
    %v123 = vpop.f32.mrf.mxu0
    %124 = vmatprep.mubr.f32.mxu0 0.0
    %125 = vmatmul.mubr.f32.gmra.mxu0 %v53
    %v126 = vpop.f32.mrf.mxu0
    %v127 = vadd.f32 %v46, %v126
    %v128 = vpop.f32.mrf.mxu0
    %129 = vdwg.mxu0
    %v130 = vmax.f32 %v122, 0.0
    %v131 = vmax.f32 %v127, 0.0
    %v132 = vld [vmem:[#allocation2] sm:$0xff]
    %v133 = vld [vmem:[#allocation2 + $0x8] sm:$0xff]
    %v134 = vld [vmem:[%s3] sm:$0xff]
    %v135 = vld [vmem:[%s3 + $0x8] sm:$0xff]
    %v136 = vld [vmem:[%s3 + $0x10] sm:$0xff]
    %v137 = vld [vmem:[%s3 + $0x18] sm:$0xff]
    %v138 = vld [vmem:[%s3 + $0x20] sm:$0xff]
    %v139 = vld [vmem:[%s3 + $0x28] sm:$0xff]
    %v140 = vld [vmem:[%s3 + $0x30] sm:$0xff]
    %v141 = vld [vmem:[%s3 + $0x38] sm:$0xff]
    %vm142 = vcmask 523264
    %v144 = vsel %vm142, %v130, 0
    %v147 = vsel %vm142, %v131, 0
    %149 = vmatprep.subr.mxu0 0.0
    %150 = vmatpush1.msra.mxu0 0.0
    %151 = vmatprep.subr.mxu0 0.0
    %152 = vmatpush1.msra.mxu0 0.0
    %153 = vmatprep.subr.mxu0 0.0
    %154 = vmatpush1.msra.mxu0 0.0
    %155 = vmatprep.subr.mxu0 0.0
    %156 = vmatpush1.msra.mxu0 0.0
    %157 = vmatprep.subr.mxu0 0.0
    %158 = vmatpush1.msra.mxu0 0.0
    %159 = vmatprep.subr.mxu0 0.0
    %160 = vmatpush1.msra.mxu0 0.0
    %161 = vmatprep.subr.mxu0 0.0
    %162 = vmatpush1.msra.mxu0 0.0
    %163 = vmatprep.subr.mxu0 0.0
    %164 = vmatpush1.msra.mxu0 0.0
    %165 = vmatprep.subr.mxu0 0.0
    %166 = vmatpush1.msra.mxu0 %v141
    %167 = vmatprep.subr.mxu0 0.0
    %168 = vmatpush1.msra.mxu0 %v140
    %169 = vmatprep.subr.mxu0 0.0
    %170 = vmatpush1.msra.mxu0 %v139
    %171 = vmatprep.subr.mxu0 0.0
    %172 = vmatpush1.msra.mxu0 %v138
    %173 = vmatprep.subr.mxu0 0.0
    %174 = vmatpush1.msra.mxu0 %v137
    %175 = vmatprep.subr.mxu0 0.0
    %176 = vmatpush1.msra.mxu0 %v136
    %177 = vmatprep.subr.mxu0 0.0
    %178 = vmatpush1.msra.mxu0 %v135
    %179 = vmatprep.subr.mxu0 0.0
    %180 = vmatpush1.msra.mxu0 %v134
    %181 = vmatprep.subr.mxu0 0.0
    %182 = vmatpush2.msra.mxu0 0.0
    %183 = vmatprep.subr.mxu0 0.0
    %184 = vmatpush2.msra.mxu0 0.0
    %185 = vmatprep.subr.mxu0 0.0
    %186 = vmatpush2.msra.mxu0 0.0
    %187 = vmatprep.subr.mxu0 0.0
    %188 = vmatpush2.msra.mxu0 0.0
    %189 = vmatprep.subr.mxu0 0.0
    %190 = vmatpush2.msra.mxu0 0.0
    %191 = vmatprep.subr.mxu0 0.0
    %192 = vmatpush2.msra.mxu0 0.0
    %193 = vmatprep.subr.mxu0 0.0
    %194 = vmatpush2.msra.mxu0 0.0
    %195 = vmatprep.subr.mxu0 0.0
    %196 = vmatpush2.msra.mxu0 0.0
    %197 = vmatprep.subr.mxu0 0.0
    %198 = vmatpush2.msra.mxu0 0.0
    %199 = vmatprep.subr.mxu0 0.0
    %200 = vmatpush2.msra.mxu0 0.0
    %201 = vmatprep.subr.mxu0 0.0
    %202 = vmatpush2.msra.mxu0 0.0
    %203 = vmatprep.subr.mxu0 0.0
    %204 = vmatpush2.msra.mxu0 0.0
    %205 = vmatprep.subr.mxu0 0.0
    %206 = vmatpush2.msra.mxu0 0.0
    %207 = vmatprep.subr.mxu0 0.0
    %208 = vmatpush2.msra.mxu0 0.0
    %209 = vmatprep.subr.mxu0 0.0
    %210 = vmatpush2.msra.mxu0 0.0
    %211 = vmatprep.subr.mxu0 0.0
    %212 = vmatpush2.msra.mxu0 0.0
    %213 = vmatprep.mubr.f32.mxu0 0.0
    %214 = vmatmul.mubr.f32.gmra.mxu0 %v144
    %v215 = vpop.f32.mrf.mxu0
    %v216 = vadd.f32 0.0, %v215
    %v217 = vpop.f32.mrf.mxu0
    %218 = vmatprep.mubr.f32.mxu0 0.0
    %219 = vmatmul.mubr.f32.gmra.mxu0 %v147
    %v220 = vpop.f32.mrf.mxu0
    %v221 = vadd.f32 0.0, %v220
    %v222 = vpop.f32.mrf.mxu0
    %223 = vdwg.mxu0
    %v224 = vadd.f32 %v132, %v216
    %v225 = vadd.f32 %v133, %v221
    %226 = vst.msk [vmem:[#allocation2] sm:$0xff] %vm48, %v224
    %227 = vst.msk [vmem:[#allocation2 + $0x8] sm:$0xff] %vm48, %v225
    // Predicated region
    $region26: #{tpu_custom_call.1} parent=1 // pred_check
      _
    $region27: #{tpu_custom_call.1} parent=1 // pred_check_branch
      %229 = sbr.rel (0) target = $region29
    $region28: #{tpu_custom_call.1} parent=1 // pred_region
      %s231 = ssub.s32 256, 256
      %232 = vsyncadd [#allocation3], %s231
      %s233 = sshll.u32 [#allocation2], 4
      %s234 = int_to_ptr.vmem [resolvable:$true] %s233
      %239 = dma.vmem_to_hbm [thread:$0]  %s234, 256, %s5, [#allocation3], 128, 128, 8
    $region29: #{tpu_custom_call.1} parent=1 // pred_fallthru
      _
    // Predicated region
    $region30: #{tpu_custom_call.1} parent=1 // pred_check
      _
    $region31: #{tpu_custom_call.1} parent=1 // pred_check_branch
      %241 = sbr.rel (0) target = $region33
    $region32: #{tpu_custom_call.1} parent=1 // pred_region
      %242 = dma.done [#allocation3], 256
    $region33: #{tpu_custom_call.1} parent=1 // pred_fallthru
      _
    %243 = vsyncpa [#allocation3], 1

</llo_original>
